<compile_context>
chip_gen: v7x
topology: tpu7x:2x2x1
jax: 0.10.0
libtpu: 0.0.40
codegen_flags: <defaults>
</compile_context>

<pallas_src>
import numpy as np
import jax
import jax.numpy as jnp
from jax.experimental import pallas as pl
from jax.experimental.pallas import tpu as pltpu

H_IN, W_IN = 7, 7
H_OUT, W_OUT = 3, 3


def _build_pool_matrix():
    """Build the (49, 9) float32 linear map equivalent to second_pooling.forward."""
    base = np.array([[1, 1], [3, 1], [5, 1], [2, 3], [4, 3], [3, 5]], dtype=np.int64)
    bx = base[:, 0]
    by = base[:, 1]
    bxm1 = np.maximum(bx - 1, 0)
    bxp1 = np.minimum(bx + 1, H_IN - 1)
    bym1 = np.maximum(by - 1, 0)
    byp1 = np.minimum(by + 1, W_IN - 1)

    # map to refine2 (3x3) coordinates
    mx = np.floor(base[:, 0] / 2).astype(np.int64)
    my = np.floor(base[:, 1] / 2).astype(np.int64)
    mx = mx - (my % 2)

    W = np.zeros((H_IN * W_IN, H_OUT * W_OUT), dtype=np.float32)
    # the 7 gathered neighbor index-pairs per vertex, matching the forward pass
    neighbor_sets = [
        (bx, by),
        (bxm1, by),
        (bxp1, by),
        (bx, byp1),
        (bx, bym1),
        (bxp1, byp1),
        (bxp1, bym1),
    ]
    for v in range(base.shape[0]):
        out_flat = mx[v] * W_OUT + my[v]
        for (ix, iy) in neighbor_sets:
            in_flat = ix[v] * W_IN + iy[v]
            W[in_flat, out_flat] += 1.0 / 7.0
    return jnp.asarray(W)


def _pool_kernel(x_ref, w_ref, o_ref):
    # single-tile matmul on the MXU: (TM, 49) @ (49, 9) -> (TM, 9), f32 accumulate
    o_ref[...] = jnp.dot(
        x_ref[...], w_ref[...], preferred_element_type=jnp.float32
    ).astype(o_ref.dtype)


def _round_up(x, m):
    return (x + m - 1) // m * m


def second_pooling_forward(x, tm=4096):
    """x: (B, C, 7, 7) -> (B, C, 3, 3) float32 (matches torch.zeros default dtype)."""
    B, C, H, Wd = x.shape
    assert (H, Wd) == (H_IN, W_IN)
    M = B * C

    # Keep activations in their native dtype (bf16 halves the dominant HBM
    # read traffic); anything exotic falls back to f32.
    if x.dtype in (jnp.dtype(jnp.bfloat16), jnp.dtype(jnp.float32)):
        compute_dtype = x.dtype
    else:
        compute_dtype = jnp.dtype(jnp.float32)
    x_flat = x.reshape(M, H_IN * W_IN).astype(compute_dtype)
    w = _build_pool_matrix().astype(compute_dtype)

    # Tile the M dimension.  Sublane alignment: 8 rows for f32, 16 for bf16.
    row_align = 16 if compute_dtype == jnp.dtype(jnp.bfloat16) else 8
    tm_eff = min(_round_up(tm, row_align), _round_up(M, row_align))
    m_pad = _round_up(M, tm_eff)
    if m_pad != M:
        x_flat = jnp.pad(x_flat, ((0, m_pad - M), (0, 0)))

    grid = (m_pad // tm_eff,)
    out_flat = pl.pallas_call(
        _pool_kernel,
        out_shape=jax.ShapeDtypeStruct((m_pad, H_OUT * W_OUT), jnp.float32),
        grid_spec=pltpu.PrefetchScalarGridSpec(
            num_scalar_prefetch=0,
            grid=grid,
            in_specs=[
                pl.BlockSpec((tm_eff, H_IN * W_IN), lambda i: (i, 0)),
                # W is tiny and has a constant block index, so the pipeline
                # fetches it once and does not re-DMA it per grid step.
                pl.BlockSpec((H_IN * W_IN, H_OUT * W_OUT), lambda i: (0, 0)),
            ],
            out_specs=pl.BlockSpec((tm_eff, H_OUT * W_OUT), lambda i: (i, 0)),
        ),
        compiler_params=pltpu.CompilerParams(
            # Independent M tiles -> shard across TensorCores on v7x.
            dimension_semantics=("parallel",),
        ),
    )(x_flat, w)

    return out_flat[:M].reshape(B, C, H_OUT, W_OUT)


def _reference(x):
    """Pure numpy reference mirroring the PyTorch forward (for validation)."""
    x = np.asarray(x)
    base = np.array([[1, 1], [3, 1], [5, 1], [2, 3], [4, 3], [3, 5]], dtype=np.int64)
    bx, by = base[:, 0], base[:, 1]
    bxm1 = np.maximum(bx - 1, 0)
    bxp1 = np.minimum(bx + 1, H_IN - 1)
    bym1 = np.maximum(by - 1, 0)
    byp1 = np.minimum(by + 1, W_IN - 1)
    tmp = x[:, :, bx, by].copy()
    tmp += x[:, :, bxm1, by]
    tmp += x[:, :, bxp1, by]
    tmp += x[:, :, bx, byp1]
    tmp += x[:, :, bx, bym1]
    tmp += x[:, :, bxp1, byp1]
    tmp += x[:, :, bxp1, bym1]
    tmp *= 1.0 / 7.0
    mx = np.floor(base[:, 0] / 2).astype(np.int64)
    my = np.floor(base[:, 1] / 2).astype(np.int64)
    mx = mx - (my % 2)
    out = np.zeros((x.shape[0], x.shape[1], H_OUT, W_OUT), dtype=np.float32)
    out[:, :, mx, my] = tmp
    return out


if __name__ == "__main__":
    key = jax.random.PRNGKey(0)
    B, C = 2, 4
    x = jax.random.normal(key, (B, C, H_IN, W_IN), dtype=jnp.float32)

    out = second_pooling_forward(x)
    out = jax.block_until_ready(out)

    ref = _reference(np.asarray(x))
    np.testing.assert_allclose(np.asarray(out), ref, rtol=1e-5, atol=1e-5)

    # also exercise the tiled path with a non-tile-multiple, larger M
    B2, C2 = 3, 37  # M = 111, not a multiple of 8 -> exercises padding
    x2 = jax.random.normal(jax.random.PRNGKey(1), (B2, C2, H_IN, W_IN), dtype=jnp.float32)
    out2 = jax.block_until_ready(second_pooling_forward(x2, tm=64))
    np.testing.assert_allclose(np.asarray(out2), _reference(np.asarray(x2)),
                               rtol=1e-5, atol=1e-5)

    print("KERNEL_OK")
</pallas_src>

<mosaic_0001>
module attributes {stable_mosaic.version = 11 : i64} {
  func.func @_pool_kernel(%arg0: i32, %arg1: memref<8x49xf32, #tpu.memory_space<vmem>>, %arg2: memref<49x9xf32, #tpu.memory_space<vmem>>, %arg3: memref<8x9xf32, #tpu.memory_space<vmem>>) attributes {dimension_semantics = [#tpu.dimension_semantics<parallel>], iteration_bounds = array<i64: 1>, scalar_prefetch = 0 : i64, scratch_operands = 0 : i64, tpu.core_type = #tpu.core_type<tc>, window_params = [{transform_indices = @transform_0, window_bounds = array<i64: 8, 49>}, {pipeline_mode = #tpu.pipeline_mode<synchronous>, transform_indices = @transform_1, window_bounds = array<i64: 49, 9>}, {transform_indices = @transform_2, window_bounds = array<i64: 8, 9>}]} {
    %c0 = arith.constant 0 : index
    %c0_0 = arith.constant 0 : index
    %0 = vector.load %arg1[%c0, %c0_0] : memref<8x49xf32, #tpu.memory_space<vmem>>, vector<8x49xf32>
    %c0_1 = arith.constant 0 : index
    %c0_2 = arith.constant 0 : index
    %1 = vector.load %arg2[%c0_1, %c0_2] : memref<49x9xf32, #tpu.memory_space<vmem>>, vector<49x9xf32>
    %cst = arith.constant dense<0.000000e+00> : vector<8x9xf32>
    %2 = tpu.matmul %0, %1, %cst {dimension_numbers = #tpu.dot_dimension_numbers<[1], [0], [0], [1], [0, 0, 1, 1], [], []>} : vector<8x49xf32>, vector<49x9xf32>, vector<8x9xf32> -> vector<8x9xf32>
    %c0_3 = arith.constant 0 : index
    %c0_4 = arith.constant 0 : index
    %3 = vector.load %arg3[%c0_3, %c0_4] : memref<8x9xf32, #tpu.memory_space<vmem>>, vector<8x9xf32>
    tpu.vector_store %arg3[%c0_3, %c0_4], %2 {strides = array<i32>} : memref<8x9xf32, #tpu.memory_space<vmem>>, vector<8x9xf32>,
    return
  }
  func.func @transform_0(%arg0: i32) -> (i32, i32) {
    %c0_i32 = arith.constant 0 : i32
    %c0_i32_0 = arith.constant 0 : i32
    return %arg0, %c0_i32 : i32, i32
  }
  func.func @transform_1(%arg0: i32) -> (i32, i32) {
    %c0_i32 = arith.constant 0 : i32
    %c0_i32_0 = arith.constant 0 : i32
    %c0_i32_1 = arith.constant 0 : i32
    return %c0_i32, %c0_i32_0 : i32, i32
  }
  func.func @transform_2(%arg0: i32) -> (i32, i32) {
    %c0_i32 = arith.constant 0 : i32
    %c0_i32_0 = arith.constant 0 : i32
    return %arg0, %c0_i32 : i32, i32
  }
}

</mosaic_0001>

<llo_original>
// kernel: tpu_custom_call.1
$region0: #{tpu_custom_call.1}
  #allocation0 [shape = 'u32[]', space=smem, size = 0x4, offset = 0x4, fixed_abs, tag = 'smem constant byte address 0x4 - core index']
  #allocation1 [shape = 'u32[144,128]{1,0:T(1,128)}', space=vmem, size = 0x12000, scoped, tag = 'internal scratch']
  %s0 = inlined_call_operand.vmem [shape: f32[8,49], index: 0, kind: input, shape index: {}]
  %s1 = inlined_call_operand.vmem [shape: f32[49,9], index: 1, kind: input, shape index: {}]
  %s2 = inlined_call_operand.hbm [shape: f32[8,9], index: 2, kind: output, shape index: {}]
  %s3 = sld [smem:[#allocation0]]
  $region18: #{tpu_custom_call.1} parent=0
    _
  %s5 = ssub.s32 1, %s3
  %s6 = scalar_select 0, %s5, %s3
  $region1: #{tpu_custom_call.1} parent=0
    #allocation2 [shape = 'u8[4096]{0}', space=vmem, size = 0x1000, scoped, tag = 'output window, operand 0, single buffered']
    #allocation3 [shape = 's32[1]{0}', space=sflag, size = 0x4, scoped, tag = 'scoped memory for tpu_custom_call.1']
    %7 = vsyncpa [#allocation3], 0
    // Predicated region
    $region2: #{tpu_custom_call.1} parent=1 // pred_check
      _
    $region3: #{tpu_custom_call.1} parent=1 // pred_check_branch
      %9 = sbr.rel (0) target = $region5
    $region4: #{tpu_custom_call.1} parent=1 // pred_region
      _
    $region5: #{tpu_custom_call.1} parent=1 // pred_fallthru
      _
    // Predicated region
    $region6: #{tpu_custom_call.1} parent=1 // pred_check
      _
    $region7: #{tpu_custom_call.1} parent=1 // pred_check_branch
      %11 = sbr.rel (0) target = $region9
    $region8: #{tpu_custom_call.1} parent=1 // pred_region
      _
    $region9: #{tpu_custom_call.1} parent=1 // pred_fallthru
      _
    %v12 = vld [vmem:[%s0] sm:$0xff]
    %v13 = vld [vmem:[%s1] sm:$0xff]
    %v14 = vld [vmem:[%s1 + $0x8] sm:$0xff]
    %v15 = vld [vmem:[%s1 + $0x10] sm:$0xff]
    %v16 = vld [vmem:[%s1 + $0x18] sm:$0xff]
    %v17 = vld [vmem:[%s1 + $0x20] sm:$0xff]
    %v18 = vld [vmem:[%s1 + $0x28] sm:$0xff]
    %v19 = vld [vmem:[%s1 + $0x30] sm:$0x1]
    %vm20 = vcmask 400384
    %v22 = vsel %vm20, %v12, 0
    %vm24 = vcmask 1040384
    %v26 = vsel %vm24, %v19, 0
    %28 = vmatprep.subr.mxu0 0.0
    %29 = vmatpush1.msra.mxu0 %v13
    %30 = vmatprep.subr.mxu0 0.0
    %31 = vmatpush1.msra.mxu0 %v14
    %32 = vmatprep.subr.mxu0 0.0
    %33 = vmatpush1.msra.mxu0 %v15
    %34 = vmatprep.subr.mxu0 0.0
    %35 = vmatpush1.msra.mxu0 %v16
    %36 = vmatprep.subr.mxu0 0.0
    %37 = vmatpush1.msra.mxu0 %v17
    %38 = vmatprep.subr.mxu0 0.0
    %39 = vmatpush1.msra.mxu0 %v18
    %40 = vmatprep.subr.mxu0 0.0
    %41 = vmatpush1.msra.mxu0 %v26
    %42 = vmatprep.subr.mxu0 0.0
    %43 = vmatpush1.msra.mxu0 0.0
    %44 = vmatprep.subr.mxu0 0.0
    %45 = vmatpush1.msra.mxu0 0.0
    %46 = vmatprep.subr.mxu0 0.0
    %47 = vmatpush1.msra.mxu0 0.0
    %48 = vmatprep.subr.mxu0 0.0
    %49 = vmatpush1.msra.mxu0 0.0
    %50 = vmatprep.subr.mxu0 0.0
    %51 = vmatpush1.msra.mxu0 0.0
    %52 = vmatprep.subr.mxu0 0.0
    %53 = vmatpush1.msra.mxu0 0.0
    %54 = vmatprep.subr.mxu0 0.0
    %55 = vmatpush1.msra.mxu0 0.0
    %56 = vmatprep.subr.mxu0 0.0
    %57 = vmatpush1.msra.mxu0 0.0
    %58 = vmatprep.subr.mxu0 0.0
    %59 = vmatpush1.msra.mxu0 0.0
    %60 = vmatprep.subr.mxu0 0.0
    %61 = vmatpush1.msra.mxu0 0.0
    %62 = vmatprep.subr.mxu0 0.0
    %63 = vmatpush1.msra.mxu0 0.0
    %64 = vmatprep.subr.mxu0 0.0
    %65 = vmatpush1.msra.mxu0 0.0
    %66 = vmatprep.subr.mxu0 0.0
    %67 = vmatpush1.msra.mxu0 0.0
    %68 = vmatprep.subr.mxu0 0.0
    %69 = vmatpush1.msra.mxu0 0.0
    %70 = vmatprep.subr.mxu0 0.0
    %71 = vmatpush1.msra.mxu0 0.0
    %72 = vmatprep.subr.mxu0 0.0
    %73 = vmatpush1.msra.mxu0 0.0
    %74 = vmatprep.subr.mxu0 0.0
    %75 = vmatpush1.msra.mxu0 0.0
    %76 = vmatprep.subr.mxu0 0.0
    %77 = vmatpush1.msra.mxu0 0.0
    %78 = vmatprep.subr.mxu0 0.0
    %79 = vmatpush1.msra.mxu0 0.0
    %80 = vmatprep.subr.mxu0 0.0
    %81 = vmatpush1.msra.mxu0 0.0
    %82 = vmatprep.subr.mxu0 0.0
    %83 = vmatpush1.msra.mxu0 0.0
    %84 = vmatprep.subr.mxu0 0.0
    %85 = vmatpush1.msra.mxu0 0.0
    %86 = vmatprep.subr.mxu0 0.0
    %87 = vmatpush1.msra.mxu0 0.0
    %88 = vmatprep.subr.mxu0 0.0
    %89 = vmatpush1.msra.mxu0 0.0
    %90 = vmatprep.subr.mxu0 0.0
    %91 = vmatpush1.msra.mxu0 0.0
    %92 = vmatprep.mubr.f32.mxu0 0.0
    %93 = vmatmul.mubr.f32.gmra.mrb[0].mxu0 %v22
    %v94 = vpop.f32.mrb[0].mxu0
    %v95 = vadd.f32 0.0, %v94
    %v96 = vpop.f32.mrb[0].mxu0
    %97 = vdwg.mxu0
    %vm98 = vcmask 72704
    %99 = vst.msk [vmem:[#allocation2] sm:$0xff] %vm98, %v95
    // Predicated region
    $region10: #{tpu_custom_call.1} parent=1 // pred_check
      _
    $region11: #{tpu_custom_call.1} parent=1 // pred_check_branch
      %101 = sbr.rel (0) target = $region13
    $region12: #{tpu_custom_call.1} parent=1 // pred_region
      %s103 = ssub.s32 128, 128
      %104 = vsyncadd [#allocation3], %s103
      %s106 = sshll.u32 [#allocation2], 4
      %s107 = int_to_ptr.vmem [resolvable:$true] %s106
      %109 = dma.vmem_to_hbm [thread:$0]  %s107, 128, %s2, [#allocation3]
    $region13: #{tpu_custom_call.1} parent=1 // pred_fallthru
      _
    // Predicated region
    $region14: #{tpu_custom_call.1} parent=1 // pred_check
      _
    $region15: #{tpu_custom_call.1} parent=1 // pred_check_branch
      %111 = sbr.rel (0) target = $region17
    $region16: #{tpu_custom_call.1} parent=1 // pred_region
      %112 = dma.done [#allocation3], 128
    $region17: #{tpu_custom_call.1} parent=1 // pred_fallthru
      _
    %113 = vsyncpa [#allocation3], 1

</llo_original>
